<compile_context>
chip_gen: v5e
topology: v5e:2x2
jax: 0.10.0
libtpu: 0.0.40
codegen_flags: <defaults>
</compile_context>

<pallas_src>
import jax
import jax.numpy as jnp
from jax import lax
from jax.experimental import pallas as pl
from jax.experimental.pallas import tpu as pltpu


def _attend_kernel(q_ref, k_ref, v_ref, mk_ref, mv_ref, o_ref,
                   m_sc, l_sc, acc_sc):
    # q_ref: (Bblk, Sq, D); k_ref/v_ref: (Bblk, Tk, D)
    # mk_ref/mv_ref: (M, D) -- batch-invariant, VMEM-resident across the grid
    # scratch: m_sc/l_sc (Bblk, Sq, 1) f32, acc_sc (Bblk, Sq, D) f32
    Bb, Sq, D = q_ref.shape
    M = mk_ref.shape[0]
    kv = pl.program_id(1)

    # Feed the MXU bf16, accumulate f32 (standard flash-attention tradeoff).
    cdt = jnp.bfloat16 if jnp.issubdtype(q_ref.dtype, jnp.floating) else q_ref.dtype

    scale = jnp.float32(D ** (-0.5))
    # Fold the softmax scale into q (Sq*D muls instead of Sq*(M+Sk)).
    q = (q_ref[...].astype(jnp.float32) * scale).astype(cdt)      # (Bb, Sq, D)

    @pl.when(kv == 0)
    def _init():
        # Memory-KV path: batch-invariant, so flatten batch into the row axis
        # and do a single flat 2D matmul instead of Bb tiny batched passes.
        mk = mk_ref[...].astype(cdt)                              # (M, D)
        mv = mv_ref[...].astype(cdt)                              # (M, D)
        if Sq % 8 == 0:
            q2 = q.reshape(Bb * Sq, D)
            # Contract on the shared feature axis -> no mk transpose.
            sim_m = lax.dot_general(q2, mk, (((1,), (1,)), ((), ())),
                                    preferred_element_type=jnp.float32)  # (Bb*Sq, M)
            m0 = jnp.max(sim_m, axis=-1, keepdims=True)
            p_m = jnp.exp(sim_m - m0)
            l0 = jnp.sum(p_m, axis=-1, keepdims=True)
            acc0 = jnp.dot(p_m.astype(cdt), mv,
                           preferred_element_type=jnp.float32)           # (Bb*Sq, D)
            m_sc[...] = m0.reshape(Bb, Sq, 1)
            l_sc[...] = l0.reshape(Bb, Sq, 1)
            acc_sc[...] = acc0.reshape(Bb, Sq, D)
        else:
            # Sublane-misaligned Sq: keep the batched form (the flat reshape
            # would force a relayout) -- correctness fallback only.
            mk_b = jnp.broadcast_to(mk[None], (Bb, M, D))
            mv_b = jnp.broadcast_to(mv[None], (Bb, M, D))
            sim_m = jnp.einsum('bqd,bjd->bqj', q, mk_b,
                               preferred_element_type=jnp.float32)
            m0 = jnp.max(sim_m, axis=-1, keepdims=True)
            p_m = jnp.exp(sim_m - m0)
            m_sc[...] = m0
            l_sc[...] = jnp.sum(p_m, axis=-1, keepdims=True)
            acc_sc[...] = jnp.einsum('bqj,bjd->bqd', p_m.astype(cdt), mv_b,
                                     preferred_element_type=jnp.float32)

    # Regular key/value tile: flash-style online-softmax update over the
    # concatenated [mem ; k] key axis (state already seeded by the mem path).
    k = k_ref[...].astype(cdt)
    v = v_ref[...].astype(cdt)
    # Contract on the stored last (feature) axis -> no k transpose on the XLU.
    sim = jnp.einsum('bqd,bkd->bqk', q, k,
                     preferred_element_type=jnp.float32)          # (Bb, Sq, Tk)
    m_prev = m_sc[...]
    m_new = jnp.maximum(m_prev, jnp.max(sim, axis=-1, keepdims=True))
    alpha = jnp.exp(m_prev - m_new)
    p = jnp.exp(sim - m_new)
    l_sc[...] = alpha * l_sc[...] + jnp.sum(p, axis=-1, keepdims=True)
    acc_sc[...] = alpha * acc_sc[...] + jnp.einsum(
        'bqk,bkd->bqd', p.astype(cdt), v, preferred_element_type=jnp.float32)
    m_sc[...] = m_new

    @pl.when(kv == pl.num_programs(1) - 1)
    def _finalize():
        inv_l = pl.reciprocal(l_sc[...], approx=True)             # EUP slot
        o_ref[...] = (acc_sc[...] * inv_l).astype(o_ref.dtype)


def _vmem_capacity_bytes():
    """Per-core physical VMEM; conservative (v7x) fallback if unqueryable."""
    try:
        return int(pltpu.get_tpu_info().vmem_capacity_bytes)
    except Exception:
        return 64 * 1024 * 1024


def _pick_tk(Sk, max_tk=512):
    """Largest key-tile that divides Sk, is sublane-aligned, and bounds the
    f32 sim/p intermediates; falls back to the full key length."""
    if Sk <= max_tk:
        return Sk
    for t in range(max_tk, 7, -1):
        if Sk % t == 0 and t % 8 == 0:
            return t
    return Sk


def _step_bytes(Bblk, Sq, Tk, D, M, in_itemsize):
    """Per-grid-step VMEM estimate: double-buffered I/O tiles + resident
    memory KV + f32 online-softmax scratch + f32 sim/p intermediates."""
    f32 = 4
    io = 2 * (Bblk * Sq * D * in_itemsize          # q (double-buffered)
              + 2 * Bblk * Tk * D * in_itemsize    # k, v
              + Bblk * Sq * D * in_itemsize)       # out
    mem = 2 * M * D * in_itemsize                  # resident mem k/v
    scratch = Bblk * Sq * (2 + D) * f32            # m, l, acc
    interm = (2 * Bblk * Sq * Tk                   # sim, p
              + 2 * Bblk * Sq * M                  # mem-path sim, p
              + 2 * Bblk * Sq * D) * f32           # mem-path acc + bf16 temps
    return io + mem + scratch + interm


def _pick_bblk(BN, Sq, Tk, D, M, in_itemsize, budget):
    # Keep >= 2 steps on the "parallel" batch axis so both v7x TensorCores
    # get work (harmless on single-TC v5e/v6e).
    cap = BN // 2 if BN >= 2 else BN
    best = 1
    for d in range(1, BN + 1):
        if BN % d == 0 and d <= cap and \
                _step_bytes(d, Sq, Tk, D, M, in_itemsize) <= budget:
            best = d
    return best


def memory_scale_attend_3d(q, k, v, mem_kv, attention_mask=None):
    """q, k, v: (B, 1, S, D); mem_kv: (2, 1, M, D). Returns (B, 1, Sq, D)."""
    # TODO(synk): attention_mask path not implemented (module default is None).
    # TODO(synk): training-mode dropout on attention weights not implemented
    #             (drop_prob defaults to 0.0 -> identity in inference).
    assert attention_mask is None

    B, N, Sq, D = q.shape
    _, _, Sk, _ = k.shape
    two, n_mem, M, Dm = mem_kv.shape
    assert two == 2 and n_mem == 1 and Dm == D
    assert N == 1  # torch.cat([mk (b,1,M,D), k (b,N,Sk,D)]) requires N == 1

    BN = B * N
    q3 = q.reshape(BN, Sq, D)
    k3 = k.reshape(BN, Sk, D)
    v3 = v.reshape(BN, Sk, D)
    mem_k = mem_kv[0, 0]   # (M, D) -- batch-invariant, passed once
    mem_v = mem_kv[1, 0]   # (M, D)

    itemsize = jnp.dtype(q.dtype).itemsize
    vmem_cap = _vmem_capacity_bytes()                       # 128 MiB v5e/v6e, 64 MiB v7x
    vmem_limit = min(vmem_cap * 3 // 4, 100 * 1024 * 1024)  # raise above scoped default
    budget = int(vmem_limit * 0.8)                          # headroom for compiler scratch

    Tk = _pick_tk(Sk)
    Bblk = _pick_bblk(BN, Sq, Tk, D, M, itemsize, budget)
    grid = (BN // Bblk, Sk // Tk)

    out = pl.pallas_call(
        _attend_kernel,
        out_shape=jax.ShapeDtypeStruct((BN, Sq, D), q.dtype),
        grid_spec=pltpu.PrefetchScalarGridSpec(
            num_scalar_prefetch=0,
            grid=grid,
            in_specs=[
                pl.BlockSpec((Bblk, Sq, D), lambda i, kv: (i, 0, 0)),
                pl.BlockSpec((Bblk, Tk, D), lambda i, kv: (i, kv, 0)),
                pl.BlockSpec((Bblk, Tk, D), lambda i, kv: (i, kv, 0)),
                # Constant block index -> memory kv stays VMEM-resident
                # across the whole grid (no per-step re-DMA).
                pl.BlockSpec((M, D), lambda i, kv: (0, 0)),
                pl.BlockSpec((M, D), lambda i, kv: (0, 0)),
            ],
            out_specs=pl.BlockSpec((Bblk, Sq, D), lambda i, kv: (i, 0, 0)),
            scratch_shapes=[
                pltpu.VMEM((Bblk, Sq, 1), jnp.float32),   # running max
                pltpu.VMEM((Bblk, Sq, 1), jnp.float32),   # running denom
                pltpu.VMEM((Bblk, Sq, D), jnp.float32),   # running accumulator
            ],
        ),
        compiler_params=pltpu.CompilerParams(
            dimension_semantics=("parallel", "arbitrary"),
            vmem_limit_bytes=int(vmem_limit),
        ),
    )(q3, k3, v3, mem_k, mem_v)

    return out.reshape(B, N, Sq, D)


def _reference(q, k, v, mem_kv):
    """Plain-JAX replica of the PyTorch forward (for verification)."""
    B = q.shape[0]
    D = q.shape[-1]
    mk = jnp.broadcast_to(mem_kv[0][None], (B,) + mem_kv[0].shape)
    mv = jnp.broadcast_to(mem_kv[1][None], (B,) + mem_kv[1].shape)
    k = jnp.concatenate([mk, k], axis=-2)
    v = jnp.concatenate([mv, v], axis=-2)
    sim = jnp.einsum("bnid,bnjd->bnij", q, k) * (D ** -0.5)
    attn = jax.nn.softmax(sim, axis=-1)
    return jnp.einsum("bnij,bnjd->bnid", attn, v)


if __name__ == "__main__":
    # module hyperparameters
    n_heads, head_dim, n_mem_size = 2, 16, 4
    D = n_heads * head_dim                       # 32
    B, N, Sq, Sk = 2, 1, 8, 8

    key = jax.random.PRNGKey(0)
    kq, kk, kv, kmem = jax.random.split(key, 4)
    q = jax.random.normal(kq, (B, N, Sq, D), dtype=jnp.float32)
    k = jax.random.normal(kk, (B, N, Sk, D), dtype=jnp.float32)
    v = jax.random.normal(kv, (B, N, Sk, D), dtype=jnp.float32)
    # deterministic stand-in for nn.Parameter(torch.randn(2, 1, M, D))
    mem_kv = jax.random.normal(kmem, (2, 1, n_mem_size, D), dtype=jnp.float32)

    out = memory_scale_attend_3d(q, k, v, mem_kv)
    out = jax.block_until_ready(out)

    ref = _reference(q, k, v, mem_kv)
    assert out.shape == (B, N, Sq, D)
    # tolerance vs. the f32 reference accounts for bf16 MXU operands
    # (f32 accumulation) and the EUP approximate reciprocal in the softmax
    # denominator -- the standard flash-attention precision tradeoff.
    assert jnp.allclose(out, ref, atol=5e-2, rtol=5e-2)

    print("KERNEL_OK")
</pallas_src>

<mosaic_0001>
module attributes {stable_mosaic.version = 11 : i64} {
  func.func @_attend_kernel(%arg0: i32, %arg1: i32, %arg2: memref<1x8x32xf32, #tpu.memory_space<vmem>>, %arg3: memref<1x8x32xf32, #tpu.memory_space<vmem>>, %arg4: memref<1x8x32xf32, #tpu.memory_space<vmem>>, %arg5: memref<4x32xf32, #tpu.memory_space<vmem>>, %arg6: memref<4x32xf32, #tpu.memory_space<vmem>>, %arg7: memref<1x8x32xf32, #tpu.memory_space<vmem>>, %arg8: memref<1x8x1xf32, #tpu.memory_space<vmem>>, %arg9: memref<1x8x1xf32, #tpu.memory_space<vmem>>, %arg10: memref<1x8x32xf32, #tpu.memory_space<vmem>>) attributes {dimension_semantics = [#tpu.dimension_semantics<parallel>, #tpu.dimension_semantics<arbitrary>], iteration_bounds = array<i64: 2, 1>, scalar_prefetch = 0 : i64, scratch_operands = 3 : i64, tpu.core_type = #tpu.core_type<tc>, window_params = [{transform_indices = @transform_0, window_bounds = array<i64: 1, 8, 32>}, {transform_indices = @transform_1, window_bounds = array<i64: 1, 8, 32>}, {transform_indices = @transform_2, window_bounds = array<i64: 1, 8, 32>}, {pipeline_mode = #tpu.pipeline_mode<synchronous>, transform_indices = @transform_3, window_bounds = array<i64: 4, 32>}, {pipeline_mode = #tpu.pipeline_mode<synchronous>, transform_indices = @transform_4, window_bounds = array<i64: 4, 32>}, {transform_indices = @transform_5, window_bounds = array<i64: 1, 8, 32>}]} {
    %c0 = arith.constant 0 : index
    %c0_0 = arith.constant 0 : index
    %c0_1 = arith.constant 0 : index
    %0 = vector.load %arg2[%c0, %c0_0, %c0_1] : memref<1x8x32xf32, #tpu.memory_space<vmem>>, vector<1x8x32xf32>
    %cst = arith.constant 0.176776692 : f32
    %1 = vector.broadcast %cst : f32 to vector<1x8x32xf32>
    %2 = arith.mulf %0, %1 : vector<1x8x32xf32>
    %3 = arith.truncf %2 : vector<1x8x32xf32> to vector<1x8x32xbf16>
    %c0_i32 = arith.constant 0 : i32
    %4 = arith.cmpi eq, %arg1, %c0_i32 : i32
    %5 = arith.extui %4 : i1 to i32
    %c0_i32_2 = arith.constant 0 : i32
    %6 = arith.cmpi ne, %5, %c0_i32_2 : i32
    scf.if %6 {
      %c0_33 = arith.constant 0 : index
      %c0_34 = arith.constant 0 : index
      %38 = vector.load %arg5[%c0_33, %c0_34] : memref<4x32xf32, #tpu.memory_space<vmem>>, vector<4x32xf32>
      %39 = arith.truncf %38 : vector<4x32xf32> to vector<4x32xbf16>
      %c0_35 = arith.constant 0 : index
      %c0_36 = arith.constant 0 : index
      %40 = vector.load %arg6[%c0_35, %c0_36] : memref<4x32xf32, #tpu.memory_space<vmem>>, vector<4x32xf32>
      %41 = arith.truncf %40 : vector<4x32xf32> to vector<4x32xbf16>
      %42 = vector.shape_cast %3 : vector<1x8x32xbf16> to vector<8x32xbf16>
      %cst_37 = arith.constant dense<0.000000e+00> : vector<8x4xf32>
      %43 = tpu.matmul %42, %39, %cst_37 {dimension_numbers = #tpu.dot_dimension_numbers<[1], [1], [0], [0], [0, 0, 1, 0], [], []>} : vector<8x32xbf16>, vector<4x32xbf16>, vector<8x4xf32> -> vector<8x4xf32>
      %cst_38 = arith.constant dense<0xFF800000> : vector<8xf32>
      %44 = vector.multi_reduction <maximumf>, %43, %cst_38 [1] : vector<8x4xf32> to vector<8xf32>
      %45 = vector.shape_cast %44 : vector<8xf32> to vector<8x1xf32>
      %46 = vector.broadcast %45 : vector<8x1xf32> to vector<8x4xf32>
      %47 = arith.subf %43, %46 : vector<8x4xf32>
      %48 = math.exp %47 : vector<8x4xf32>
      %cst_39 = arith.constant dense<0.000000e+00> : vector<8xf32>
      %49 = vector.multi_reduction <add>, %48, %cst_39 [1] : vector<8x4xf32> to vector<8xf32>
      %50 = vector.shape_cast %49 : vector<8xf32> to vector<8x1xf32>
      %51 = arith.truncf %48 : vector<8x4xf32> to vector<8x4xbf16>
      %cst_40 = arith.constant dense<0.000000e+00> : vector<8x32xf32>
      %52 = tpu.matmul %51, %41, %cst_40 {dimension_numbers = #tpu.dot_dimension_numbers<[1], [0], [0], [1], [0, 0, 1, 1], [], []>} : vector<8x4xbf16>, vector<4x32xbf16>, vector<8x32xf32> -> vector<8x32xf32>
      %53 = vector.shape_cast %45 : vector<8x1xf32> to vector<1x8x1xf32>
      %c0_41 = arith.constant 0 : index
      %c0_42 = arith.constant 0 : index
      %c0_43 = arith.constant 0 : index
      %54 = vector.load %arg8[%c0_41, %c0_42, %c0_43] : memref<1x8x1xf32, #tpu.memory_space<vmem>>, vector<1x8x1xf32>
      tpu.vector_store %arg8[%c0_41, %c0_42, %c0_43], %53 {strides = array<i32>} : memref<1x8x1xf32, #tpu.memory_space<vmem>>, vector<1x8x1xf32>,
      %55 = vector.shape_cast %50 : vector<8x1xf32> to vector<1x8x1xf32>
      %c0_44 = arith.constant 0 : index
      %c0_45 = arith.constant 0 : index
      %c0_46 = arith.constant 0 : index
      %56 = vector.load %arg9[%c0_44, %c0_45, %c0_46] : memref<1x8x1xf32, #tpu.memory_space<vmem>>, vector<1x8x1xf32>
      tpu.vector_store %arg9[%c0_44, %c0_45, %c0_46], %55 {strides = array<i32>} : memref<1x8x1xf32, #tpu.memory_space<vmem>>, vector<1x8x1xf32>,
      %57 = vector.shape_cast %52 : vector<8x32xf32> to vector<1x8x32xf32>
      %c0_47 = arith.constant 0 : index
      %c0_48 = arith.constant 0 : index
      %c0_49 = arith.constant 0 : index
      %58 = vector.load %arg10[%c0_47, %c0_48, %c0_49] : memref<1x8x32xf32, #tpu.memory_space<vmem>>, vector<1x8x32xf32>
      tpu.vector_store %arg10[%c0_47, %c0_48, %c0_49], %57 {strides = array<i32>} : memref<1x8x32xf32, #tpu.memory_space<vmem>>, vector<1x8x32xf32>,
    } else {
    }
    %c0_3 = arith.constant 0 : index
    %c0_4 = arith.constant 0 : index
    %c0_5 = arith.constant 0 : index
    %7 = vector.load %arg3[%c0_3, %c0_4, %c0_5] : memref<1x8x32xf32, #tpu.memory_space<vmem>>, vector<1x8x32xf32>
    %8 = arith.truncf %7 : vector<1x8x32xf32> to vector<1x8x32xbf16>
    %c0_6 = arith.constant 0 : index
    %c0_7 = arith.constant 0 : index
    %c0_8 = arith.constant 0 : index
    %9 = vector.load %arg4[%c0_6, %c0_7, %c0_8] : memref<1x8x32xf32, #tpu.memory_space<vmem>>, vector<1x8x32xf32>
    %10 = arith.truncf %9 : vector<1x8x32xf32> to vector<1x8x32xbf16>
    "tpu.trace_start"() <{level = 10 : i32, message = "bqd,bkd->bqk"}> : () -> ()
    %cst_9 = arith.constant dense<0.000000e+00> : vector<1x8x8xf32>
    %11 = tpu.matmul %3, %8, %cst_9 {dimension_numbers = #tpu.dot_dimension_numbers<[2], [2], [1], [1], [0, 0, 0, 1, 1, 1], [0], [0]>} : vector<1x8x32xbf16>, vector<1x8x32xbf16>, vector<1x8x8xf32> -> vector<1x8x8xf32>
    "tpu.trace_stop"() : () -> ()
    %c0_10 = arith.constant 0 : index
    %c0_11 = arith.constant 0 : index
    %c0_12 = arith.constant 0 : index
    %12 = vector.load %arg8[%c0_10, %c0_11, %c0_12] : memref<1x8x1xf32, #tpu.memory_space<vmem>>, vector<1x8x1xf32>
    %cst_13 = arith.constant dense<0xFF800000> : vector<1x8xf32>
    %13 = vector.multi_reduction <maximumf>, %11, %cst_13 [2] : vector<1x8x8xf32> to vector<1x8xf32>
    %14 = vector.shape_cast %13 : vector<1x8xf32> to vector<1x8x1xf32>
    %15 = arith.maximumf %12, %14 : vector<1x8x1xf32>
    %16 = arith.subf %12, %15 : vector<1x8x1xf32>
    %17 = math.exp %16 : vector<1x8x1xf32>
    %18 = vector.broadcast %15 : vector<1x8x1xf32> to vector<1x8x8xf32>
    %19 = arith.subf %11, %18 : vector<1x8x8xf32>
    %20 = math.exp %19 : vector<1x8x8xf32>
    %c0_14 = arith.constant 0 : index
    %c0_15 = arith.constant 0 : index
    %c0_16 = arith.constant 0 : index
    %21 = vector.load %arg9[%c0_14, %c0_15, %c0_16] : memref<1x8x1xf32, #tpu.memory_space<vmem>>, vector<1x8x1xf32>
    %22 = arith.mulf %17, %21 : vector<1x8x1xf32>
    %cst_17 = arith.constant dense<0.000000e+00> : vector<1x8xf32>
    %23 = vector.multi_reduction <add>, %20, %cst_17 [2] : vector<1x8x8xf32> to vector<1x8xf32>
    %24 = vector.shape_cast %23 : vector<1x8xf32> to vector<1x8x1xf32>
    %25 = arith.addf %22, %24 : vector<1x8x1xf32>
    %c0_18 = arith.constant 0 : index
    %c0_19 = arith.constant 0 : index
    %c0_20 = arith.constant 0 : index
    %26 = vector.load %arg9[%c0_18, %c0_19, %c0_20] : memref<1x8x1xf32, #tpu.memory_space<vmem>>, vector<1x8x1xf32>
    tpu.vector_store %arg9[%c0_18, %c0_19, %c0_20], %25 {strides = array<i32>} : memref<1x8x1xf32, #tpu.memory_space<vmem>>, vector<1x8x1xf32>,
    %c0_21 = arith.constant 0 : index
    %c0_22 = arith.constant 0 : index
    %c0_23 = arith.constant 0 : index
    %27 = vector.load %arg10[%c0_21, %c0_22, %c0_23] : memref<1x8x32xf32, #tpu.memory_space<vmem>>, vector<1x8x32xf32>
    %28 = vector.broadcast %17 : vector<1x8x1xf32> to vector<1x8x32xf32>
    %29 = arith.mulf %28, %27 : vector<1x8x32xf32>
    %30 = arith.truncf %20 : vector<1x8x8xf32> to vector<1x8x8xbf16>
    "tpu.trace_start"() <{level = 10 : i32, message = "bqk,bkd->bqd"}> : () -> ()
    %cst_24 = arith.constant dense<0.000000e+00> : vector<1x8x32xf32>
    %31 = tpu.matmul %30, %10, %cst_24 {dimension_numbers = #tpu.dot_dimension_numbers<[2], [1], [1], [2], [0, 0, 0, 1, 1, 2], [0], [0]>} : vector<1x8x8xbf16>, vector<1x8x32xbf16>, vector<1x8x32xf32> -> vector<1x8x32xf32>
    "tpu.trace_stop"() : () -> ()
    %32 = arith.addf %29, %31 : vector<1x8x32xf32>
    %c0_25 = arith.constant 0 : index
    %c0_26 = arith.constant 0 : index
    %c0_27 = arith.constant 0 : index
    %33 = vector.load %arg10[%c0_25, %c0_26, %c0_27] : memref<1x8x32xf32, #tpu.memory_space<vmem>>, vector<1x8x32xf32>
    tpu.vector_store %arg10[%c0_25, %c0_26, %c0_27], %32 {strides = array<i32>} : memref<1x8x32xf32, #tpu.memory_space<vmem>>, vector<1x8x32xf32>,
    %c0_28 = arith.constant 0 : index
    %c0_29 = arith.constant 0 : index
    %c0_30 = arith.constant 0 : index
    %34 = vector.load %arg8[%c0_28, %c0_29, %c0_30] : memref<1x8x1xf32, #tpu.memory_space<vmem>>, vector<1x8x1xf32>
    tpu.vector_store %arg8[%c0_28, %c0_29, %c0_30], %15 {strides = array<i32>} : memref<1x8x1xf32, #tpu.memory_space<vmem>>, vector<1x8x1xf32>,
    %c0_i32_31 = arith.constant 0 : i32
    %35 = arith.cmpi eq, %arg1, %c0_i32_31 : i32
    %36 = arith.extui %35 : i1 to i32
    %c0_i32_32 = arith.constant 0 : i32
    %37 = arith.cmpi ne, %36, %c0_i32_32 : i32
    scf.if %37 {
      %c0_33 = arith.constant 0 : index
      %c0_34 = arith.constant 0 : index
      %c0_35 = arith.constant 0 : index
      %38 = vector.load %arg9[%c0_33, %c0_34, %c0_35] : memref<1x8x1xf32, #tpu.memory_space<vmem>>, vector<1x8x1xf32>
      %39 = tpu.reciprocal %38 {approx = true} : vector<1x8x1xf32> -> vector<1x8x1xf32>
      %c0_36 = arith.constant 0 : index
      %c0_37 = arith.constant 0 : index
      %c0_38 = arith.constant 0 : index
      %40 = vector.load %arg10[%c0_36, %c0_37, %c0_38] : memref<1x8x32xf32, #tpu.memory_space<vmem>>, vector<1x8x32xf32>
      %41 = vector.broadcast %39 : vector<1x8x1xf32> to vector<1x8x32xf32>
      %42 = arith.mulf %40, %41 : vector<1x8x32xf32>
      %c0_39 = arith.constant 0 : index
      %c0_40 = arith.constant 0 : index
      %c0_41 = arith.constant 0 : index
      %43 = vector.load %arg7[%c0_39, %c0_40, %c0_41] : memref<1x8x32xf32, #tpu.memory_space<vmem>>, vector<1x8x32xf32>
      tpu.vector_store %arg7[%c0_39, %c0_40, %c0_41], %42 {strides = array<i32>} : memref<1x8x32xf32, #tpu.memory_space<vmem>>, vector<1x8x32xf32>,
    } else {
    }
    return
  }
  func.func @transform_0(%arg0: i32, %arg1: i32) -> (i32, i32, i32) {
    %c0_i32 = arith.constant 0 : i32
    %c0_i32_0 = arith.constant 0 : i32
    %c0_i32_1 = arith.constant 0 : i32
    return %arg0, %c0_i32, %c0_i32_0 : i32, i32, i32
  }
  func.func @transform_1(%arg0: i32, %arg1: i32) -> (i32, i32, i32) {
    %c0_i32 = arith.constant 0 : i32
    %c0_i32_0 = arith.constant 0 : i32
    return %arg0, %arg1, %c0_i32 : i32, i32, i32
  }
  func.func @transform_2(%arg0: i32, %arg1: i32) -> (i32, i32, i32) {
    %c0_i32 = arith.constant 0 : i32
    %c0_i32_0 = arith.constant 0 : i32
    return %arg0, %arg1, %c0_i32 : i32, i32, i32
  }
  func.func @transform_3(%arg0: i32, %arg1: i32) -> (i32, i32) {
    %c0_i32 = arith.constant 0 : i32
    %c0_i32_0 = arith.constant 0 : i32
    %c0_i32_1 = arith.constant 0 : i32
    return %c0_i32, %c0_i32_0 : i32, i32
  }
  func.func @transform_4(%arg0: i32, %arg1: i32) -> (i32, i32) {
    %c0_i32 = arith.constant 0 : i32
    %c0_i32_0 = arith.constant 0 : i32
    %c0_i32_1 = arith.constant 0 : i32
    return %c0_i32, %c0_i32_0 : i32, i32
  }
  func.func @transform_5(%arg0: i32, %arg1: i32) -> (i32, i32, i32) {
    %c0_i32 = arith.constant 0 : i32
    %c0_i32_0 = arith.constant 0 : i32
    %c0_i32_1 = arith.constant 0 : i32
    return %arg0, %c0_i32, %c0_i32_0 : i32, i32, i32
  }
}

</mosaic_0001>

<llo_original>
// kernel: tpu_custom_call.1
$region0: #{tpu_custom_call.1}
  #allocation0 [shape = 'u32[]', space=smem, size = 0x4, offset = 0x4, fixed_abs, tag = 'smem constant byte address 0x4 - core index']
  #allocation1 [shape = 'u32[72,128]{1,0:T(1,128)}', space=vmem, size = 0x9000, scoped, tag = 'internal scratch']
  #allocation2 [shape = 'f32[1,8,1]{2,1,0:T(8,128)}', space=vmem, size = 0x1000, scoped, tag = 'scratch operand']
  #allocation3 [shape = 'f32[1,8,1]{2,1,0:T(8,128)}', space=vmem, size = 0x1000, scoped, tag = 'scratch operand']
  #allocation4 [shape = 'f32[1,8,32]{2,1,0:T(8,128)}', space=vmem, size = 0x1000, scoped, tag = 'scratch operand']
  %s0 = inlined_call_operand.hbm [shape: f32[2,8,32], index: 0, kind: input, shape index: {}]
  %s1 = inlined_call_operand.hbm [shape: f32[2,8,32], index: 1, kind: input, shape index: {}]
  %s2 = inlined_call_operand.hbm [shape: f32[2,8,32], index: 2, kind: input, shape index: {}]
  %s3 = inlined_call_operand.hbm [shape: f32[4,32], index: 3, kind: input, shape index: {}]
  %s4 = inlined_call_operand.hbm [shape: f32[4,32], index: 4, kind: input, shape index: {}]
  %s5 = inlined_call_operand.hbm [shape: f32[2,8,32], index: 5, kind: output, shape index: {}]
  %s6 = sld [smem:[#allocation0]]
  $region81: #{tpu_custom_call.1} parent=0
    _
  %s8 = ssub.s32 1, %s6
  %s9 = scalar_select 0, %s8, %s6
  $region1: #{tpu_custom_call.1} parent=0
    #allocation5 [shape = 'u8[8192]{0}', space=vmem, size = 0x2000, scoped, tag = 'input window, operand 0']
    #allocation6 [shape = 's32[2]{0}', space=sflag, size = 0x8, scoped, tag = 'scoped memory for tpu_custom_call.1']
    #allocation7 [shape = 's32[2]{0}', space=sflag, size = 0x8, scoped, tag = 'scoped memory for tpu_custom_call.1']
    #allocation8 [shape = 'u8[8192]{0}', space=vmem, size = 0x2000, scoped, tag = 'input window, operand 1']
    #allocation9 [shape = 's32[2]{0}', space=sflag, size = 0x8, scoped, tag = 'scoped memory for tpu_custom_call.1']
    #allocation10 [shape = 'u8[8192]{0}', space=vmem, size = 0x2000, scoped, tag = 'input window, operand 2']
    #allocation11 [shape = 'u8[2048]{0}', space=vmem, size = 0x800, scoped, tag = 'input window, operand 3, single buffered']
    #allocation12 [shape = 's32[1]{0}', space=sflag, size = 0x4, scoped, tag = 'scoped memory for tpu_custom_call.1']
    #allocation13 [shape = 'u8[2048]{0}', space=vmem, size = 0x800, scoped, tag = 'input window, operand 4, single buffered']
    #allocation14 [shape = 'u8[8192]{0}', space=vmem, size = 0x2000, scoped, tag = 'output window, operand 0']
    %10 = vsyncpa [#allocation6], 0
    %s11 = scalar_lea.sflag [#allocation6], 1
    %12 = vsyncpa %s11, 0
    %13 = vsyncpa [#allocation9], 0
    %s14 = scalar_lea.sflag [#allocation9], 1
    %15 = vsyncpa %s14, 0
    %16 = vsyncpa [#allocation12], 0
    %17 = vsyncpa [#allocation7], 0
    %s18 = scalar_lea.sflag [#allocation7], 1
    %19 = vsyncpa %s18, 0
    loop: start=0, step=1, limit=4
    $region2: #{tpu_custom_call.1} parent=1 // loop_pre_header
      _
    $region3: #{tpu_custom_call.1} parent=1 // loop_header
      %s21 = sphi 0, %s25
      %p22 = scmp.ge.s32.totalorder %s21, 4
      %s28 = sphi 0, %s40
      %s29 = sphi 0, %s36
      %s30 = sphi 0, %s28
      %s31 = sphi 0, %s29
      %s32 = sphi 0, %s30
      %s33 = sphi 0, %s31
      %s43 = sphi 0, %s45
      %s46 = sphi 0, %s43
      %s47 = sphi 0, %s46
      %s63 = sphi 0, %s47
      %s71 = sphi 0, %s73
      %s74 = sphi 0, %s71
      %s75 = sphi 0, %s74
      %s91 = sphi 0, %s75
      %s99 = sphi 0, %s101
      %s102 = sphi 0, %s99
      %s103 = sphi 0, %s102
      %s119 = sphi 0, %s103
      %s123 = sphi 0, %s123
      %s125 = sphi 0, %s123
      %s126 = sphi 0, %s125
      %s140 = sphi 0, %s126
      %s144 = sphi 0, %s144
      %s146 = sphi 0, %s144
      %s147 = sphi 0, %s146
      %s161 = sphi 0, %s147
      %s167 = sphi 0, %s169
      %s170 = sphi 0, %s167
      %s171 = sphi 0, %s170
      %s187 = sphi 0, %s171
    $region4: #{tpu_custom_call.1} parent=1 // loop_header_branch
      %24 = sbr.rel (%p22) target = $region8
    $region5: #{tpu_custom_call.1} parent=1 // loop_body
      %s26 = ssub.s32 %s21, 1
      %s27 = ssub.s32 %s21, 2
      %s34 = sadd.s32 1, %s29
      %p35 = scmp.ge.s32.totalorder %s34, 1
      %s36 = scalar_select %p35, 0, %s34
      %s37 = sadd.s32 1, %s28
      %s38 = scalar_select %p35, %s37, %s28
      %p39 = scmp.ge.s32.totalorder %s38, 2
      %s40 = scalar_select %p39, 0, %s38
      %s41 = ssub.s32 %s28, %s40
      %p42 = scmp.eq.s32.totalorder %s41, 0
      %s44 = sadd.s32 %s43, 1
      %s45 = scalar_select %p42, %s43, %s44
      %p48 = pneg %p42
      %p49 = scmp.eq.s32.totalorder %s21, 1
      %p50 = por %p48, %p49
      %p51 = scmp.ne.s32.totalorder %s43, %s46
      %p52 = scmp.eq.s32.totalorder %s21, 0
      %p53 = por %p51, %p52
      %p54 = scmp.ne.s32.totalorder %s43, %s46
      %p55 = scmp.eq.s32.totalorder %s26, 1
      %p56 = por %p54, %p55
      %p57 = scmp.ne.s32.totalorder %s46, %s47
      %p58 = scmp.eq.s32.totalorder %s26, 0
      %p59 = por %p57, %p58
      %p60 = scmp.ne.s32.totalorder %s46, %s47
      %p61 = scmp.eq.s32.totalorder %s27, 1
      %p62 = por %p60, %p61
      %p64 = scmp.ne.s32.totalorder %s47, %s63
      %p65 = scmp.eq.s32.totalorder %s27, 0
      %p66 = por %p64, %p65
      %s67 = ssub.s32 %s28, %s40
      %s68 = ssub.s32 %s29, %s36
      %s69 = sor.u32 %s67, %s68
      %p70 = scmp.eq.s32.totalorder %s69, 0
      %s72 = sadd.s32 %s71, 1
      %s73 = scalar_select %p70, %s71, %s72
      %p76 = pneg %p70
      %p77 = scmp.eq.s32.totalorder %s21, 1
      %p78 = por %p76, %p77
      %p79 = scmp.ne.s32.totalorder %s71, %s74
      %p80 = scmp.eq.s32.totalorder %s21, 0
      %p81 = por %p79, %p80
      %p82 = scmp.ne.s32.totalorder %s71, %s74
      %p83 = scmp.eq.s32.totalorder %s26, 1
      %p84 = por %p82, %p83
      %p85 = scmp.ne.s32.totalorder %s74, %s75
      %p86 = scmp.eq.s32.totalorder %s26, 0
      %p87 = por %p85, %p86
      %p88 = scmp.ne.s32.totalorder %s74, %s75
      %p89 = scmp.eq.s32.totalorder %s27, 1
      %p90 = por %p88, %p89
      %p92 = scmp.ne.s32.totalorder %s75, %s91
      %p93 = scmp.eq.s32.totalorder %s27, 0
      %p94 = por %p92, %p93
      %s95 = ssub.s32 %s28, %s40
      %s96 = ssub.s32 %s29, %s36
      %s97 = sor.u32 %s95, %s96
      %p98 = scmp.eq.s32.totalorder %s97, 0
      %s100 = sadd.s32 %s99, 1
      %s101 = scalar_select %p98, %s99, %s100
      %p104 = pneg %p98
      %p105 = scmp.eq.s32.totalorder %s21, 1
      %p106 = por %p104, %p105
      %p107 = scmp.ne.s32.totalorder %s99, %s102
      %p108 = scmp.eq.s32.totalorder %s21, 0
      %p109 = por %p107, %p108
      %p110 = scmp.ne.s32.totalorder %s99, %s102
      %p111 = scmp.eq.s32.totalorder %s26, 1
      %p112 = por %p110, %p111
      %p113 = scmp.ne.s32.totalorder %s102, %s103
      %p114 = scmp.eq.s32.totalorder %s26, 0
      %p115 = por %p113, %p114
      %p116 = scmp.ne.s32.totalorder %s102, %s103
      %p117 = scmp.eq.s32.totalorder %s27, 1
      %p118 = por %p116, %p117
      %p120 = scmp.ne.s32.totalorder %s103, %s119
      %p121 = scmp.eq.s32.totalorder %s27, 0
      %p122 = por %p120, %p121
      %s124 = sadd.s32 %s123, 1
      %p127 = scmp.eq.s32.totalorder %s21, 1
      %p128 = scmp.ne.s32.totalorder %s123, %s125
      %p129 = scmp.eq.s32.totalorder %s21, 0
      %p130 = por %p128, %p129
      %p131 = scmp.ne.s32.totalorder %s123, %s125
      %p132 = scmp.eq.s32.totalorder %s26, 1
      %p133 = por %p131, %p132
      %p134 = scmp.ne.s32.totalorder %s125, %s126
      %p135 = scmp.eq.s32.totalorder %s26, 0
      %p136 = por %p134, %p135
      %p137 = scmp.ne.s32.totalorder %s125, %s126
      %p138 = scmp.eq.s32.totalorder %s27, 1
      %p139 = por %p137, %p138
      %p141 = scmp.ne.s32.totalorder %s126, %s140
      %p142 = scmp.eq.s32.totalorder %s27, 0
      %p143 = por %p141, %p142
      %s145 = sadd.s32 %s144, 1
      %p148 = scmp.eq.s32.totalorder %s21, 1
      %p149 = scmp.ne.s32.totalorder %s144, %s146
      %p150 = scmp.eq.s32.totalorder %s21, 0
      %p151 = por %p149, %p150
      %p152 = scmp.ne.s32.totalorder %s144, %s146
      %p153 = scmp.eq.s32.totalorder %s26, 1
      %p154 = por %p152, %p153
      %p155 = scmp.ne.s32.totalorder %s146, %s147
      %p156 = scmp.eq.s32.totalorder %s26, 0
      %p157 = por %p155, %p156
      %p158 = scmp.ne.s32.totalorder %s146, %s147
      %p159 = scmp.eq.s32.totalorder %s27, 1
      %p160 = por %p158, %p159
      %p162 = scmp.ne.s32.totalorder %s147, %s161
      %p163 = scmp.eq.s32.totalorder %s27, 0
      %p164 = por %p162, %p163
      %s165 = ssub.s32 %s28, %s40
      %p166 = scmp.eq.s32.totalorder %s165, 0
      %s168 = sadd.s32 %s167, 1
      %s169 = scalar_select %p166, %s167, %s168
      %p172 = pneg %p166
      %p173 = scmp.eq.s32.totalorder %s21, 1
      %p174 = por %p172, %p173
      %p175 = scmp.ne.s32.totalorder %s167, %s170
      %p176 = scmp.eq.s32.totalorder %s21, 0
      %p177 = por %p175, %p176
      %p178 = scmp.ne.s32.totalorder %s167, %s170
      %p179 = scmp.eq.s32.totalorder %s26, 1
      %p180 = por %p178, %p179
      %p181 = scmp.ne.s32.totalorder %s170, %s171
      %p182 = scmp.eq.s32.totalorder %s26, 0
      %p183 = por %p181, %p182
      %p184 = scmp.ne.s32.totalorder %s170, %s171
      %p185 = scmp.eq.s32.totalorder %s27, 1
      %p186 = por %p184, %p185
      %p188 = scmp.ne.s32.totalorder %s171, %s187
      %p189 = scmp.eq.s32.totalorder %s27, 0
      %p190 = por %p188, %p189
      %p191 = scmp.le.s32.totalorder 1, %s21
      %p192 = scmp.lt.s32.totalorder %s21, 3
      %p193 = pnand %p191, %p192
      %p194 = pneg %p193
      // Predicated region
      $region9: #{tpu_custom_call.1} parent=5 // pred_check
        _
      $region10: #{tpu_custom_call.1} parent=5 // pred_check_branch
        %196 = sbr.rel (%p193) target = $region12
      $region11: #{tpu_custom_call.1} parent=5 // pred_region
        %s197 = ssub.s32 %s21, 1
        // Predicated region
        $region13: #{tpu_custom_call.1} parent=11 // pred_check
          %p198 = pneg %p136
        $region14: #{tpu_custom_call.1} parent=11 // pred_check_branch
          %200 = sbr.rel (%p198) target = $region16
        $region15: #{tpu_custom_call.1} parent=11 // pred_region
          %202 = vsyncadd [#allocation12], 0
          %s204 = sshll.u32 %s3, 4
          %s205 = int_to_ptr.hbm [resolvable:$true] %s204
          %s206 = sshll.u32 [#allocation11], 4
          %s207 = int_to_ptr.vmem [resolvable:$true] %s206
          %209 = dma.hbm_to_vmem [thread:$0]  %s205, 64, %s207, [#allocation12]
        $region16: #{tpu_custom_call.1} parent=11 // pred_fallthru
          _
        // Predicated region
        $region17: #{tpu_custom_call.1} parent=11 // pred_check
          %p210 = pneg %p157
        $region18: #{tpu_custom_call.1} parent=11 // pred_check_branch
          %212 = sbr.rel (%p210) target = $region20
        $region19: #{tpu_custom_call.1} parent=11 // pred_region
          %214 = vsyncadd [#allocation12], 0
          %s216 = sshll.u32 %s4, 4
          %s217 = int_to_ptr.hbm [resolvable:$true] %s216
          %s218 = sshll.u32 [#allocation13], 4
          %s219 = int_to_ptr.vmem [resolvable:$true] %s218
          %221 = dma.hbm_to_vmem [thread:$0]  %s217, 64, %s219, [#allocation12]
        $region20: #{tpu_custom_call.1} parent=11 // pred_fallthru
          _
      $region12: #{tpu_custom_call.1} parent=5 // pred_fallthru
        _
      %p222 = scmp.lt.s32.totalorder %s21, 2
      // Predicated region
      $region21: #{tpu_custom_call.1} parent=5 // pred_check
        %p223 = pneg %p222
      $region22: #{tpu_custom_call.1} parent=5 // pred_check_branch
        %225 = sbr.rel (%p223) target = $region24
      $region23: #{tpu_custom_call.1} parent=5 // pred_region
        // Predicated region
        $region25: #{tpu_custom_call.1} parent=23 // pred_check
          %p226 = pneg %p53
        $region26: #{tpu_custom_call.1} parent=23 // pred_check_branch
          %228 = sbr.rel (%p226) target = $region28
        $region27: #{tpu_custom_call.1} parent=23 // pred_region
          %s229 = sand.u32 %s43, 1
          %s230 = scalar_lea.sflag [#allocation6], %s229
          %s231 = sand.u32 %s43, 1
          %s232 = smul.addr %s231, 8
          %s233 = scalar_lea.vmem [#allocation5], %s232
          %235 = vsyncadd %s230, 0
          %s236 = smul.addr %s28, 8
          %s237 = scalar_lea.hbm %s0, %s236
          %s239 = sshll.u32 %s237, 4
          %s240 = int_to_ptr.hbm [resolvable:$true] %s239
          %s241 = sshll.u32 %s233, 4
          %s242 = int_to_ptr.vmem [resolvable:$true] %s241
          %244 = dma.hbm_to_vmem [thread:$0]  %s240, 128, %s242, %s230
        $region28: #{tpu_custom_call.1} parent=23 // pred_fallthru
          _
        // Predicated region
        $region29: #{tpu_custom_call.1} parent=23 // pred_check
          %p245 = pneg %p81
        $region30: #{tpu_custom_call.1} parent=23 // pred_check_branch
          %247 = sbr.rel (%p245) target = $region32
        $region31: #{tpu_custom_call.1} parent=23 // pred_region
          %s248 = sand.u32 %s21, 1
          %s249 = scalar_lea.sflag [#allocation9], %s248
          %s250 = sand.u32 %s71, 1
          %s251 = smul.addr %s250, 8
          %s252 = scalar_lea.vmem [#allocation8], %s251
          %254 = vsyncadd %s249, 0
          %s255 = sadd.s32 %s29, %s28
          %s256 = smul.addr %s255, 8
          %s257 = scalar_lea.hbm %s1, %s256
          %s259 = sshll.u32 %s257, 4
          %s260 = int_to_ptr.hbm [resolvable:$true] %s259
          %s261 = sshll.u32 %s252, 4
          %s262 = int_to_ptr.vmem [resolvable:$true] %s261
          %264 = dma.hbm_to_vmem [thread:$0]  %s260, 128, %s262, %s249
        $region32: #{tpu_custom_call.1} parent=23 // pred_fallthru
          _
        // Predicated region
        $region33: #{tpu_custom_call.1} parent=23 // pred_check
          %p265 = pneg %p109
        $region34: #{tpu_custom_call.1} parent=23 // pred_check_branch
          %267 = sbr.rel (%p265) target = $region36
        $region35: #{tpu_custom_call.1} parent=23 // pred_region
          %s268 = sand.u32 %s21, 1
          %s269 = scalar_lea.sflag [#allocation9], %s268
          %s270 = sand.u32 %s99, 1
          %s271 = smul.addr %s270, 8
          %s272 = scalar_lea.vmem [#allocation10], %s271
          %274 = vsyncadd %s269, 0
          %s275 = sadd.s32 %s29, %s28
          %s276 = smul.addr %s275, 8
          %s277 = scalar_lea.hbm %s2, %s276
          %s279 = sshll.u32 %s277, 4
          %s280 = int_to_ptr.hbm [resolvable:$true] %s279
          %s281 = sshll.u32 %s272, 4
          %s282 = int_to_ptr.vmem [resolvable:$true] %s281
          %284 = dma.hbm_to_vmem [thread:$0]  %s280, 128, %s282, %s269
        $region36: #{tpu_custom_call.1} parent=23 // pred_fallthru
          _
      $region24: #{tpu_custom_call.1} parent=5 // pred_fallthru
        _
      %p285 = scmp.le.s32.totalorder 1, %s21
      %p286 = scmp.lt.s32.totalorder %s21, 3
      %p287 = pnand %p285, %p286
      %p288 = pneg %p287
      // Predicated region
      $region37: #{tpu_custom_call.1} parent=5 // pred_check
        _
      $region38: #{tpu_custom_call.1} parent=5 // pred_check_branch
        %290 = sbr.rel (%p287) target = $region40
      $region39: #{tpu_custom_call.1} parent=5 // pred_region
        %s291 = ssub.s32 %s21, 1
        %s292 = sand.u32 %s46, 1
        %s293 = scalar_lea.sflag [#allocation6], %s292
        %s294 = sand.u32 %s46, 1
        %s295 = smul.addr %s294, 8
        %s296 = scalar_lea.vmem [#allocation5], %s295
        // Predicated region
        $region41: #{tpu_custom_call.1} parent=39 // pred_check
          %p297 = pneg %p59
        $region42: #{tpu_custom_call.1} parent=39 // pred_check_branch
          %299 = sbr.rel (%p297) target = $region44
        $region43: #{tpu_custom_call.1} parent=39 // pred_region
          %301 = dma.done %s293, 128
        $region44: #{tpu_custom_call.1} parent=39 // pred_fallthru
          _
        %s302 = sand.u32 %s26, 1
        %s303 = scalar_lea.sflag [#allocation9], %s302
        %s304 = sand.u32 %s74, 1
        %s305 = smul.addr %s304, 8
        %s306 = scalar_lea.vmem [#allocation8], %s305
        // Predicated region
        $region45: #{tpu_custom_call.1} parent=39 // pred_check
          %p307 = pneg %p87
        $region46: #{tpu_custom_call.1} parent=39 // pred_check_branch
          %309 = sbr.rel (%p307) target = $region48
        $region47: #{tpu_custom_call.1} parent=39 // pred_region
          %311 = dma.done %s303, 128
        $region48: #{tpu_custom_call.1} parent=39 // pred_fallthru
          _
        %s312 = sand.u32 %s26, 1
        %s313 = scalar_lea.sflag [#allocation9], %s312
        %s314 = sand.u32 %s102, 1
        %s315 = smul.addr %s314, 8
        %s316 = scalar_lea.vmem [#allocation10], %s315
        // Predicated region
        $region49: #{tpu_custom_call.1} parent=39 // pred_check
          %p317 = pneg %p115
        $region50: #{tpu_custom_call.1} parent=39 // pred_check_branch
          %319 = sbr.rel (%p317) target = $region52
        $region51: #{tpu_custom_call.1} parent=39 // pred_region
          %321 = dma.done %s313, 128
        $region52: #{tpu_custom_call.1} parent=39 // pred_fallthru
          _
        // Predicated region
        $region53: #{tpu_custom_call.1} parent=39 // pred_check
          %p322 = pneg %p136
        $region54: #{tpu_custom_call.1} parent=39 // pred_check_branch
          %324 = sbr.rel (%p322) target = $region56
        $region55: #{tpu_custom_call.1} parent=39 // pred_region
          %326 = dma.done [#allocation12], 64
        $region56: #{tpu_custom_call.1} parent=39 // pred_fallthru
          _
        // Predicated region
        $region57: #{tpu_custom_call.1} parent=39 // pred_check
          %p327 = pneg %p157
        $region58: #{tpu_custom_call.1} parent=39 // pred_check_branch
          %329 = sbr.rel (%p327) target = $region60
        $region59: #{tpu_custom_call.1} parent=39 // pred_region
          %331 = dma.done [#allocation12], 64
        $region60: #{tpu_custom_call.1} parent=39 // pred_fallthru
          _
        %s332 = sand.u32 %s46, 1
        %s333 = scalar_lea.sflag [#allocation6], %s332
        %s334 = sand.u32 %s46, 1
        %s335 = smul.addr %s334, 8
        %s336 = scalar_lea.vmem [#allocation5], %s335
        %p337 = pneg %p59
        %p338 = pneg %p56
        %s339 = sand.u32 %s26, 1
        %s340 = scalar_lea.sflag [#allocation9], %s339
        %s341 = sand.u32 %s74, 1
        %s342 = smul.addr %s341, 8
        %s343 = scalar_lea.vmem [#allocation8], %s342
        %p344 = pneg %p87
        %p345 = pneg %p84
        %s346 = sand.u32 %s26, 1
        %s347 = scalar_lea.sflag [#allocation9], %s346
        %s348 = sand.u32 %s102, 1
        %s349 = smul.addr %s348, 8
        %s350 = scalar_lea.vmem [#allocation10], %s349
        %p351 = pneg %p115
        %p352 = pneg %p112
        %p353 = pneg %p136
        %p354 = pneg %p133
        %p355 = pneg %p157
        %p356 = pneg %p154
        %p357 = pneg %p183
        %p358 = pneg %p180
        %s359 = sand.u32 %s170, 1
        %s360 = scalar_lea.sflag [#allocation7], %s359
        %s361 = sand.u32 %s170, 1
        %s362 = smul.addr %s361, 8
        %s363 = scalar_lea.vmem [#allocation14], %s362
        %v365 = vld [vmem:[%s296] sm:$0xff]
        %v366 = vmul.f32 %v365, 0.17677669
        %v367 = vpack.c.bf16 %v366, %v366
        %p368 = scmp.eq.s32.totalorder %s31, 0
        // Predicated region
        $region61: #{tpu_custom_call.1} parent=39 // pred_check
          %p369 = pneg %p368
        $region62: #{tpu_custom_call.1} parent=39 // pred_check_branch
          %371 = sbr.rel (%p369) target = $region64
        $region63: #{tpu_custom_call.1} parent=39 // pred_region
          %v372 = vld [vmem:[#allocation11] sm:$0xf]
          %v373 = vpack.c.bf16 %v372, %v372
          %v374 = vld [vmem:[#allocation13] sm:$0xf]
          %v375 = vpack.c.bf16 %v374, %v374
          %vm376 = vcmask 261120
          %v378 = vsel %vm376, %v367, 0
          %v381 = vsel %vm376, %v373, 0
          %383 = vmatpush.bf16.xpose.msra.mxu0 0
          %384 = vmatpush.bf16.xpose.msra.mxu0 0
          %385 = vmatpush.bf16.xpose.msra.mxu0 0
          %386 = vmatpush.bf16.xpose.msra.mxu0 0
          %387 = vmatpush.bf16.xpose.msra.mxu0 0
          %388 = vmatpush.bf16.xpose.msra.mxu0 0
          %389 = vmatpush.bf16.xpose.msra.mxu0 0
          %390 = vmatpush.bf16.xpose.msra.mxu0 %v381
          %391 = vmatmul.bf16.gmra.mxu0 %v378
          %v392 = vpop.f32.mrf.mxu0
          %v393 = vadd.f32 0.0, %v392
          %v394 = vpop.f32.mrf.mxu0
          %395 = vdwg.mxu0
          %vm396 = vcmask 31744
          %v397 = vsel %vm396, %v393, -inf
          %398 = vmax.xlane.f32.xlu0 %v397
          %v399 = vpop.xlane.xlu0 %398
          %v400 = vsub.f32 %v393, %v399
          %v401 = vmul.f32 %v400, 1.442695
          %v402 = vpow.pop %v401
          %v403 = vsel %vm396, %v402, 0.0
          %404 = vadd.xlane.f32.xlu0 %v403
          %v405 = vpop.xlane.xlu0 %404
          %v406 = vpack.c.bf16 %v402, %v402
          %v408 = vsel %vm396, %v406, 0
          %vm410 = vcmask 1041408
          %v412 = vsel %vm410, %v375, 0
          %414 = vmatpush.bf16.msra.mxu0 0
          %415 = vmatpush.bf16.msra.mxu0 0
          %416 = vmatpush.bf16.msra.mxu0 0
          %417 = vmatpush.bf16.msra.mxu0 0
          %418 = vmatpush.bf16.msra.mxu0 0
          %419 = vmatpush.bf16.msra.mxu0 0
          %420 = vmatpush.bf16.msra.mxu0 0
          %421 = vmatpush.bf16.msra.mxu0 %v412
          %422 = vmatmul.bf16.gmra.mxu0 %v408
          %v423 = vpop.f32.mrf.mxu0
          %v424 = vadd.f32 0.0, %v423
          %v425 = vpop.f32.mrf.mxu0
          %426 = vdwg.mxu0
          %vm427 = vcmask 7168
          %428 = vst.msk [vmem:[#allocation2] sm:$0xff] %vm427, %v399
          %429 = vst.msk [vmem:[#allocation3] sm:$0xff] %vm427, %v405
          %430 = vst.msk [vmem:[#allocation4] sm:$0xff] %vm376, %v424
        $region64: #{tpu_custom_call.1} parent=39 // pred_fallthru
          _
        %v431 = vld [vmem:[%s306] sm:$0xff]
        %v432 = vpack.c.bf16 %v431, %v431
        %v433 = vld [vmem:[%s316] sm:$0xff]
        %v434 = vpack.c.bf16 %v433, %v433
        %vm435 = vcmask 261120
        %v437 = vsel %vm435, %v367, 0
        %v440 = vsel %vm435, %v432, 0
        %442 = vmatpush.bf16.xpose.msra.mxu0 0
        %443 = vmatpush.bf16.xpose.msra.mxu0 0
        %444 = vmatpush.bf16.xpose.msra.mxu0 0
        %445 = vmatpush.bf16.xpose.msra.mxu0 0
        %446 = vmatpush.bf16.xpose.msra.mxu0 0
        %447 = vmatpush.bf16.xpose.msra.mxu0 0
        %448 = vmatpush.bf16.xpose.msra.mxu0 0
        %449 = vmatpush.bf16.xpose.msra.mxu0 %v440
        %450 = vmatmul.bf16.gmra.mxu0 %v437
        %v451 = vpop.f32.mrf.mxu0
        %v452 = vadd.f32 0.0, %v451
        %v453 = vpop.f32.mrf.mxu0
        %454 = vdwg.mxu0
        %v455 = vld [vmem:[#allocation2] sm:$0xff]
        %vm456 = vcmask 64512
        %v457 = vsel %vm456, %v452, -inf
        %458 = vmax.xlane.f32.xlu0 %v457
        %v459 = vpop.xlane.xlu0 %458
        %v460 = vmax.f32 %v455, %v459
        %v461 = vsub.f32 %v455, %v460
        %v462 = vmul.f32 %v461, 1.442695
        %v463 = vpow.pop %v462
        %465 = vset.pattern.permute.xlu0 0
        %466 = vperm.xlu0 %465, %v460
        %v467 = vpop.permute.xlu0 %466
        %v469 = vsub.f32 %v452, %v467
        %v470 = vmul.f32 %v469, 1.442695
        %v471 = vpow.pop %v470
        %v472 = vld [vmem:[#allocation3] sm:$0xff]
        %v473 = vmul.f32 %v463, %v472
        %v474 = vsel %vm456, %v471, 0.0
        %475 = vadd.xlane.f32.xlu0 %v474
        %v476 = vpop.xlane.xlu0 %475
        %v477 = vadd.f32 %v473, %v476
        %vm478 = vcmask 7168
        %479 = vst.msk [vmem:[#allocation3] sm:$0xff] %vm478, %v477
        %v480 = vld [vmem:[#allocation4] sm:$0xff]
        %482 = vset.pattern.permute.xlu0 0
        %483 = vperm.xlu0 %482, %v463
        %v484 = vpop.permute.xlu0 %483
        %v486 = vmul.f32 %v484, %v480
        %v487 = vpack.c.bf16 %v471, %v471
        %v489 = vsel %vm456, %v487, 0
        %vm491 = vcmask 1043456
        %v493 = vsel %vm491, %v434, 0
        %495 = vmatpush.bf16.msra.mxu0 0
        %496 = vmatpush.bf16.msra.mxu0 0
        %497 = vmatpush.bf16.msra.mxu0 0
        %498 = vmatpush.bf16.msra.mxu0 0
        %499 = vmatpush.bf16.msra.mxu0 0
        %500 = vmatpush.bf16.msra.mxu0 0
        %501 = vmatpush.bf16.msra.mxu0 0
        %502 = vmatpush.bf16.msra.mxu0 %v493
        %503 = vmatmul.bf16.gmra.mxu0 %v489
        %v504 = vpop.f32.mrf.mxu0
        %v505 = vadd.f32 0.0, %v504
        %v506 = vpop.f32.mrf.mxu0
        %507 = vdwg.mxu0
        %v508 = vadd.f32 %v486, %v505
        %509 = vst.msk [vmem:[#allocation4] sm:$0xff] %vm435, %v508
        %510 = vst.msk [vmem:[#allocation2] sm:$0xff] %vm478, %v460
        // Predicated region
        $region65: #{tpu_custom_call.1} parent=39 // pred_check
          %p511 = pneg %p368
        $region66: #{tpu_custom_call.1} parent=39 // pred_check_branch
          %513 = sbr.rel (%p511) target = $region68
        $region67: #{tpu_custom_call.1} parent=39 // pred_region
          %v514 = vld [vmem:[#allocation3] sm:$0xff]
          %v515 = vrcp.pop %v514
          %v516 = vld [vmem:[#allocation4] sm:$0xff]
          %518 = vset.pattern.permute.xlu0 0
          %519 = vperm.xlu0 %518, %v515
          %v520 = vpop.permute.xlu0 %519
          %v522 = vmul.f32 %v516, %v520
          %523 = vst.msk [vmem:[%s363] sm:$0xff] %vm435, %v522
        $region68: #{tpu_custom_call.1} parent=39 // pred_fallthru
          _
        %s524 = sand.u32 %s170, 1
        %s525 = scalar_lea.sflag [#allocation7], %s524
        %s526 = sand.u32 %s170, 1
        %s527 = smul.addr %s526, 8
        %s528 = scalar_lea.vmem [#allocation14], %s527
        // Predicated region
        $region69: #{tpu_custom_call.1} parent=39 // pred_check
          %p529 = pneg %p180
        $region70: #{tpu_custom_call.1} parent=39 // pred_check_branch
          %531 = sbr.rel (%p529) target = $region72
        $region71: #{tpu_custom_call.1} parent=39 // pred_region
          %533 = vsyncadd %s525, 0
          %s534 = smul.addr %s30, 8
          %s535 = scalar_lea.hbm %s5, %s534
          %s537 = sshll.u32 %s528, 4
          %s538 = int_to_ptr.vmem [resolvable:$true] %s537
          %s539 = sshll.u32 %s535, 4
          %s540 = int_to_ptr.hbm [resolvable:$true] %s539
          %542 = dma.vmem_to_hbm [thread:$0]  %s538, 128, %s540, %s525
        $region72: #{tpu_custom_call.1} parent=39 // pred_fallthru
          _
      $region40: #{tpu_custom_call.1} parent=5 // pred_fallthru
        _
      %p543 = scmp.le.s32.totalorder 2, %s21
      // Predicated region
      $region73: #{tpu_custom_call.1} parent=5 // pred_check
        %p544 = pneg %p543
      $region74: #{tpu_custom_call.1} parent=5 // pred_check_branch
        %546 = sbr.rel (%p544) target = $region76
      $region75: #{tpu_custom_call.1} parent=5 // pred_region
        %s547 = ssub.s32 %s21, 2
        // Predicated region
        $region77: #{tpu_custom_call.1} parent=75 // pred_check
          %p548 = pneg %p186
        $region78: #{tpu_custom_call.1} parent=75 // pred_check_branch
          %550 = sbr.rel (%p548) target = $region80
        $region79: #{tpu_custom_call.1} parent=75 // pred_region
          %s551 = sand.u32 %s171, 1
          %s552 = scalar_lea.sflag [#allocation7], %s551
          %s553 = sand.u32 %s171, 1
          %s554 = smul.addr %s553, 8
          %s555 = scalar_lea.vmem [#allocation14], %s554
          %557 = dma.done %s552, 128
        $region80: #{tpu_custom_call.1} parent=75 // pred_fallthru
          _
      $region76: #{tpu_custom_call.1} parent=5 // pred_fallthru
        _
    $region6: #{tpu_custom_call.1} parent=1 // loop_footer
      %s25 = sadd.s32 1, %s21
    $region7: #{tpu_custom_call.1} parent=1 // loop_footer_branch
      %20 = sbr.rel target = $region3
    $region8: #{tpu_custom_call.1} parent=1 // loop_exit
      _
    %558 = vsyncpa [#allocation6], 1
    %s559 = scalar_lea.sflag [#allocation6], 1
    %560 = vsyncpa %s559, 1
    %561 = vsyncpa [#allocation9], 1
    %s562 = scalar_lea.sflag [#allocation9], 1
    %563 = vsyncpa %s562, 1
    %564 = vsyncpa [#allocation12], 1
    %565 = vsyncpa [#allocation7], 1
    %s566 = scalar_lea.sflag [#allocation7], 1
    %567 = vsyncpa %s566, 1

</llo_original>
